<compile_context>
chip_gen: v7x
topology: tpu7x:2x2x1
jax: 0.10.0
libtpu: 0.0.40
codegen_flags: <defaults>
</compile_context>

<pallas_src>
import math

import jax
import jax.numpy as jnp
from jax.experimental import pallas as pl
from jax.experimental.pallas import tpu as pltpu


# ---------------------------------------------------------------------------
# Kernels
# ---------------------------------------------------------------------------
def _pe_add_kernel(x_ref, pe_ref, o_ref):
    # x_ref: (bt, ts, D); pe_ref: (ts, D) -> broadcast add over the batch tile.
    o_ref[...] = x_ref[...] + pe_ref[...]


def _pe_add_dropout_kernel(x_ref, pe_ref, mask_ref, o_ref):
    # mask_ref holds {0, 1/keep_prob} in x's dtype -> fused dropout apply.
    o_ref[...] = (x_ref[...] + pe_ref[...]) * mask_ref[...]


# ---------------------------------------------------------------------------
# PE buffer (identical to the PyTorch constructor)
# ---------------------------------------------------------------------------
def make_positional_encoding(max_len, d_model, dtype=jnp.float32):
    position = jnp.arange(max_len, dtype=jnp.float32)[:, None]
    div_term = jnp.exp(
        jnp.arange(0, d_model, 2, dtype=jnp.float32) * (-math.log(10000.0) / d_model)
    )
    pe = jnp.zeros((max_len, d_model), jnp.float32)
    pe = pe.at[:, 0::2].set(jnp.sin(position * div_term))
    pe = pe.at[:, 1::2].set(jnp.cos(position * div_term))
    return pe.astype(dtype)


# ---------------------------------------------------------------------------
# Tiling heuristic
# ---------------------------------------------------------------------------
def _choose_tiles(B, S, D, itemsize):
    # Sequence tile: full S when small, else 1024-row tiles (multiple of 8).
    # A cdiv grid handles the ragged edge (never a whole-S fallback block).
    ts = S if S <= 1024 else 1024
    # Batch tile: target ~1 MiB blocks so each grid step moves plenty of rows
    # (per-step overhead ~0.35 us; tiny blocks are pure overhead).  With
    # double-buffered x/pe/out(/mask) this stays well inside the scoped VMEM
    # limit on v5e/v6e/v7x.
    target_elems = (1 << 20) // itemsize
    bt = max(1, min(B, target_elems // max(1, ts * D)))
    return bt, ts


# ---------------------------------------------------------------------------
# Wrapper
# ---------------------------------------------------------------------------
def positional_encoding_forward(x, pe, *, dropout_p=0.2, training=False, seed=0):
    """x: [B, S, D]; pe: [max_len, D] with S <= max_len. Returns [B, S, D]."""
    B, S, D = x.shape
    assert pe.shape[0] >= S and pe.shape[1] == D

    pe_s = pe[:S].astype(x.dtype)               # native-dtype add (bf16 stays bf16)
    itemsize = jnp.dtype(x.dtype).itemsize
    bt, ts = _choose_tiles(B, S, D, itemsize)
    # Batch innermost: pe's block index (s, 0) is constant across consecutive
    # batch steps, so Pallas skips the pe re-DMA.
    grid = (pl.cdiv(S, ts), pl.cdiv(B, bt))

    apply_dropout = bool(training) and dropout_p > 0.0
    keep_prob = 1.0 - float(dropout_p)

    x_spec = pl.BlockSpec((bt, ts, D), lambda s, b: (b, s, 0))
    pe_spec = pl.BlockSpec((ts, D), lambda s, b: (s, 0))

    in_specs = [x_spec, pe_spec]
    operands = [x, pe_s]
    kernel = _pe_add_kernel
    flops = B * S * D
    bytes_accessed = 2 * B * S * D * itemsize + S * D * itemsize

    if apply_dropout:
        # TODO(synk): an in-kernel TPU hardware PRNG (pltpu.prng_*) would avoid
        # this extra mask read, but it has no CPU/interpret lowering; generate
        # the dropout scale-mask with jax.random and fuse only the apply.
        keep = jax.random.bernoulli(
            jax.random.PRNGKey(seed), p=keep_prob, shape=(B, S, D)
        )
        mask = keep.astype(x.dtype) * jnp.asarray(1.0 / keep_prob, dtype=x.dtype)
        in_specs.append(x_spec)
        operands.append(mask)
        kernel = _pe_add_dropout_kernel
        flops += B * S * D
        bytes_accessed += B * S * D * itemsize

    return pl.pallas_call(
        kernel,
        out_shape=jax.ShapeDtypeStruct((B, S, D), x.dtype),
        grid=grid,
        in_specs=in_specs,
        out_specs=x_spec,
        compiler_params=pltpu.CompilerParams(
            dimension_semantics=("parallel", "parallel"),
        ),
        cost_estimate=pl.CostEstimate(
            flops=flops, transcendentals=0, bytes_accessed=bytes_accessed
        ),
    )(*operands)


# ---------------------------------------------------------------------------
# Reference + test
# ---------------------------------------------------------------------------
def _reference_forward(x, pe):
    """Eval-mode reference (dropout is identity at inference)."""
    S = x.shape[1]
    return x + pe[:S][None]


if __name__ == "__main__":
    # Module defaults: d_model=128, dropout=0.2, max_len=32.  Small input:
    # batch=2, seq=8, hidden=d_model=128 (what the forward implies).
    B, S, D, MAX_LEN, P_DROP = 2, 8, 128, 32, 0.2

    key = jax.random.PRNGKey(0)
    x = jax.random.normal(key, (B, S, D), dtype=jnp.float32)
    pe = make_positional_encoding(MAX_LEN, D)

    # --- eval mode (dropout = identity): exact check against reference ------
    out = jax.block_until_ready(
        positional_encoding_forward(x, pe, dropout_p=P_DROP, training=False)
    )
    ref = _reference_forward(x, pe)
    assert out.shape == (B, S, D), out.shape
    assert jnp.allclose(out, ref, atol=1e-6, rtol=1e-6), float(
        jnp.max(jnp.abs(out - ref))
    )

    # --- training mode: exercise fused dropout apply -------------------------
    out_tr = jax.block_until_ready(
        positional_encoding_forward(x, pe, dropout_p=P_DROP, training=True, seed=1234)
    )
    keep = 1.0 - P_DROP
    # Every element must be either dropped (0) or kept-and-rescaled.
    structure_ok = jnp.isclose(out_tr, 0.0, atol=1e-6) | jnp.isclose(
        out_tr, ref / keep, atol=1e-5, rtol=1e-5
    )
    assert bool(jnp.all(structure_ok))
    # Keep fraction should be near 0.8 (2048 elements -> loose bounds).
    keep_frac = float(jnp.mean((jnp.abs(out_tr) > 1e-6).astype(jnp.float32)))
    assert 0.6 < keep_frac < 0.95, keep_frac

    print("KERNEL_OK")
</pallas_src>

<mosaic_0001>
module attributes {stable_mosaic.version = 11 : i64} {
  func.func @_pe_add_kernel(%arg0: i32, %arg1: i32, %arg2: memref<2x8x128xf32, #tpu.memory_space<vmem>>, %arg3: memref<8x128xf32, #tpu.memory_space<vmem>>, %arg4: memref<2x8x128xf32, #tpu.memory_space<vmem>>) attributes {dimension_semantics = [#tpu.dimension_semantics<parallel>, #tpu.dimension_semantics<parallel>], iteration_bounds = array<i64: 1, 1>, scalar_prefetch = 0 : i64, scratch_operands = 0 : i64, tpu.core_type = #tpu.core_type<tc>, window_params = [{transform_indices = @transform_0, window_bounds = array<i64: 2, 8, 128>}, {transform_indices = @transform_1, window_bounds = array<i64: 8, 128>}, {transform_indices = @transform_2, window_bounds = array<i64: 2, 8, 128>}]} {
    %c0 = arith.constant 0 : index
    %c0_0 = arith.constant 0 : index
    %c0_1 = arith.constant 0 : index
    %0 = vector.load %arg2[%c0, %c0_0, %c0_1] : memref<2x8x128xf32, #tpu.memory_space<vmem>>, vector<2x8x128xf32>
    %c0_2 = arith.constant 0 : index
    %c0_3 = arith.constant 0 : index
    %1 = vector.load %arg3[%c0_2, %c0_3] : memref<8x128xf32, #tpu.memory_space<vmem>>, vector<8x128xf32>
    %2 = vector.shape_cast %1 : vector<8x128xf32> to vector<1x8x128xf32>
    %3 = vector.broadcast %2 : vector<1x8x128xf32> to vector<2x8x128xf32>
    %4 = arith.addf %0, %3 : vector<2x8x128xf32>
    %c0_4 = arith.constant 0 : index
    %c0_5 = arith.constant 0 : index
    %c0_6 = arith.constant 0 : index
    %5 = vector.load %arg4[%c0_4, %c0_5, %c0_6] : memref<2x8x128xf32, #tpu.memory_space<vmem>>, vector<2x8x128xf32>
    tpu.vector_store %arg4[%c0_4, %c0_5, %c0_6], %4 {strides = array<i32>} : memref<2x8x128xf32, #tpu.memory_space<vmem>>, vector<2x8x128xf32>,
    return
  }
  func.func @transform_0(%arg0: i32, %arg1: i32) -> (i32, i32, i32) {
    %c0_i32 = arith.constant 0 : i32
    %c0_i32_0 = arith.constant 0 : i32
    return %arg1, %arg0, %c0_i32 : i32, i32, i32
  }
  func.func @transform_1(%arg0: i32, %arg1: i32) -> (i32, i32) {
    %c0_i32 = arith.constant 0 : i32
    %c0_i32_0 = arith.constant 0 : i32
    return %arg0, %c0_i32 : i32, i32
  }
  func.func @transform_2(%arg0: i32, %arg1: i32) -> (i32, i32, i32) {
    %c0_i32 = arith.constant 0 : i32
    %c0_i32_0 = arith.constant 0 : i32
    return %arg1, %arg0, %c0_i32 : i32, i32, i32
  }
}

</mosaic_0001>

<llo_original>
// kernel: tpu_custom_call.1
$region0: #{tpu_custom_call.1}
  #allocation0 [shape = 'u32[]', space=smem, size = 0x4, offset = 0x4, fixed_abs, tag = 'smem constant byte address 0x4 - core index']
  #allocation1 [shape = 'u32[144,128]{1,0:T(1,128)}', space=vmem, size = 0x12000, scoped, tag = 'internal scratch']
  %s0 = inlined_call_operand.hbm [shape: f32[2,8,128], index: 0, kind: input, shape index: {}]
  %s1 = inlined_call_operand.hbm [shape: f32[8,128], index: 1, kind: input, shape index: {}]
  %s2 = inlined_call_operand.hbm [shape: f32[2,8,128], index: 2, kind: output, shape index: {}]
  %s3 = sld [smem:[#allocation0]]
  $region26: #{tpu_custom_call.1} parent=0
    _
  %s5 = ssub.s32 1, %s3
  %s6 = scalar_select 0, %s5, %s3
  $region1: #{tpu_custom_call.1} parent=0
    #allocation2 [shape = 'u8[8192]{0}', space=vmem, size = 0x2000, scoped, tag = 'input window, operand 0, single buffered']
    #allocation3 [shape = 's32[1]{0}', space=sflag, size = 0x4, scoped, tag = 'scoped memory for tpu_custom_call.1']
    #allocation4 [shape = 's32[1]{0}', space=sflag, size = 0x4, scoped, tag = 'scoped memory for tpu_custom_call.1']
    #allocation5 [shape = 'u8[4096]{0}', space=vmem, size = 0x1000, scoped, tag = 'input window, operand 1, single buffered']
    #allocation6 [shape = 's32[1]{0}', space=sflag, size = 0x4, scoped, tag = 'scoped memory for tpu_custom_call.1']
    #allocation7 [shape = 'u8[8192]{0}', space=vmem, size = 0x2000, scoped, tag = 'output window, operand 0, single buffered']
    %7 = vsyncpa [#allocation3], 0
    %8 = vsyncpa [#allocation6], 0
    %9 = vsyncpa [#allocation4], 0
    // Predicated region
    $region2: #{tpu_custom_call.1} parent=1 // pred_check
      _
    $region3: #{tpu_custom_call.1} parent=1 // pred_check_branch
      %11 = sbr.rel (0) target = $region5
    $region4: #{tpu_custom_call.1} parent=1 // pred_region
      %s13 = ssub.s32 256, 256
      %14 = vsyncadd [#allocation3], %s13
      %s15 = sshll.u32 [#allocation2], 4
      %s16 = int_to_ptr.vmem [resolvable:$true] %s15
      %21 = dma.hbm_to_vmem [thread:$0]  %s0, 256, %s16, [#allocation3], 128, 128, 8
    $region5: #{tpu_custom_call.1} parent=1 // pred_fallthru
      _
    // Predicated region
    $region6: #{tpu_custom_call.1} parent=1 // pred_check
      _
    $region7: #{tpu_custom_call.1} parent=1 // pred_check_branch
      %23 = sbr.rel (0) target = $region9
    $region8: #{tpu_custom_call.1} parent=1 // pred_region
      %s25 = ssub.s32 128, 128
      %26 = vsyncadd [#allocation6], %s25
      %s28 = sshll.u32 [#allocation5], 4
      %s29 = int_to_ptr.vmem [resolvable:$true] %s28
      %31 = dma.hbm_to_vmem [thread:$0]  %s1, 128, %s29, [#allocation6]
    $region9: #{tpu_custom_call.1} parent=1 // pred_fallthru
      _
    // Predicated region
    $region10: #{tpu_custom_call.1} parent=1 // pred_check
      _
    $region11: #{tpu_custom_call.1} parent=1 // pred_check_branch
      %33 = sbr.rel (0) target = $region13
    $region12: #{tpu_custom_call.1} parent=1 // pred_region
      %34 = dma.done [#allocation3], 256
    $region13: #{tpu_custom_call.1} parent=1 // pred_fallthru
      _
    // Predicated region
    $region14: #{tpu_custom_call.1} parent=1 // pred_check
      _
    $region15: #{tpu_custom_call.1} parent=1 // pred_check_branch
      %36 = sbr.rel (0) target = $region17
    $region16: #{tpu_custom_call.1} parent=1 // pred_region
      %37 = dma.done [#allocation6], 128
    $region17: #{tpu_custom_call.1} parent=1 // pred_fallthru
      _
    %v38 = vld [vmem:[#allocation2] sm:$0xff]
    %v39 = vld [vmem:[#allocation2 + $0x8] sm:$0xff]
    %v40 = vld [vmem:[#allocation5] sm:$0xff]
    %v41 = vadd.f32 %v38, %v40
    %v42 = vadd.f32 %v39, %v40
    %43 = vst [vmem:[#allocation7] sm:$0xff] %v41
    %44 = vst [vmem:[#allocation7 + $0x8] sm:$0xff] %v42
    // Predicated region
    $region18: #{tpu_custom_call.1} parent=1 // pred_check
      _
    $region19: #{tpu_custom_call.1} parent=1 // pred_check_branch
      %46 = sbr.rel (0) target = $region21
    $region20: #{tpu_custom_call.1} parent=1 // pred_region
      %s48 = ssub.s32 256, 256
      %49 = vsyncadd [#allocation4], %s48
      %s50 = sshll.u32 [#allocation7], 4
      %s51 = int_to_ptr.vmem [resolvable:$true] %s50
      %56 = dma.vmem_to_hbm [thread:$0]  %s51, 256, %s2, [#allocation4], 128, 128, 8
    $region21: #{tpu_custom_call.1} parent=1 // pred_fallthru
      _
    // Predicated region
    $region22: #{tpu_custom_call.1} parent=1 // pred_check
      _
    $region23: #{tpu_custom_call.1} parent=1 // pred_check_branch
      %58 = sbr.rel (0) target = $region25
    $region24: #{tpu_custom_call.1} parent=1 // pred_region
      %59 = dma.done [#allocation4], 256
    $region25: #{tpu_custom_call.1} parent=1 // pred_fallthru
      _
    %60 = vsyncpa [#allocation3], 1
    %61 = vsyncpa [#allocation6], 1
    %62 = vsyncpa [#allocation4], 1

</llo_original>
